<compile_context>
chip_gen: v6e
topology: v6e:2x2x1
jax: 0.10.0
libtpu: 0.0.40
codegen_flags: <defaults>
</compile_context>

<pallas_src>
import functools

import jax
import jax.numpy as jnp
from jax import lax
from jax.experimental import pallas as pl
from jax.experimental.pallas import tpu as pltpu

_EPS = 1e-8  # nn.CosineSimilarity default eps


def _round_up(x, m):
    return ((x + m - 1) // m) * m


def _chunked_row_sums(x1_ref, x2_ref, *, chunk):
    """Per-row dot / ||x1||^2 / ||x2||^2, reduced over D in fixed-width chunks.

    Keeps intermediates chunk-sized (instead of full-tile) so VMEM is owned by
    the double-buffered input tiles.  Returns three (TB, 1) float32 arrays.
    """
    tb, d = x1_ref.shape
    chunk = min(chunk, d)

    def sums(x1c, x2c):
        x1c = x1c.astype(jnp.float32)
        x2c = x2c.astype(jnp.float32)
        return (jnp.sum(x1c * x2c, axis=1, keepdims=True),
                jnp.sum(x1c * x1c, axis=1, keepdims=True),
                jnp.sum(x2c * x2c, axis=1, keepdims=True))

    if d <= chunk:
        return sums(x1_ref[...], x2_ref[...])

    n_full = d // chunk
    rem = d - n_full * chunk

    zero = jnp.zeros((tb, 1), jnp.float32)
    dot, n1, n2 = zero, zero, zero

    def body(j, carry):
        dot, n1, n2 = carry
        off = pl.multiple_of(j * chunk, chunk)
        d_, a_, b_ = sums(x1_ref[:, pl.ds(off, chunk)],
                          x2_ref[:, pl.ds(off, chunk)])
        return dot + d_, n1 + a_, n2 + b_

    dot, n1, n2 = lax.fori_loop(0, n_full, body, (dot, n1, n2))

    if rem > 0:  # static tail chunk
        d_, a_, b_ = sums(x1_ref[:, n_full * chunk:],
                          x2_ref[:, n_full * chunk:])
        dot, n1, n2 = dot + d_, n1 + a_, n2 + b_

    return dot, n1, n2


def _cosine_loss_kernel(x1_ref, x2_ref, out_ref, acc_ref, *,
                        batch, block_b, tiles_per_core, need_mask, chunk):
    c = pl.program_id(0)           # core / parallel axis
    i = pl.program_id(1)           # batch-tile (reduction) axis

    @pl.when(i == 0)
    def _():
        acc_ref[0] = jnp.float32(0.0)

    dot, n1sq, n2sq = _chunked_row_sums(x1_ref, x2_ref, chunk=chunk)

    # PyTorch semantics: dot / sqrt(clamp_min(||x1||^2 * ||x2||^2, eps^2)).
    # rsqrt runs on the EUP slot instead of VALU sqrt+divide.
    cos = dot * lax.rsqrt(jnp.maximum(n1sq * n2sq, jnp.float32(_EPS * _EPS)))

    if need_mask:
        # Unclamped global row index masks both the partial last tile and any
        # duplicate overhang tiles from the per-core split.
        tile_g = c * tiles_per_core + i
        row = lax.broadcasted_iota(jnp.int32, cos.shape, 0) + tile_g * block_b
        cos = jnp.where(row < batch, cos, 0.0)

    acc_ref[0] += jnp.sum(cos)

    @pl.when(i == pl.num_programs(1) - 1)
    def _():
        out_ref[...] = jnp.full(out_ref.shape, acc_ref[0], jnp.float32)


def cosine_similarity_loss(x1, x2, *, block_b=None, chunk=512):
    """x1, x2: (B, D) arrays (f32 or bf16); cosine similarity along dim=1.

    Returns scalar: 1 - mean_b cos(x1_b, x2_b)   (PyTorch CosineSimilarityLoss).
    """
    assert x1.shape == x2.shape and x1.ndim == 2, "expected (B, D) inputs"
    B, D = x1.shape

    itemsize = jnp.dtype(x1.dtype).itemsize
    sub = 8 * max(1, 4 // itemsize)       # sublane multiple: f32 -> 8, bf16 -> 16
    d_pad = _round_up(D, 128)             # lane padding of the VMEM tile
    chunk_eff = min(chunk, d_pad)

    # --- generation-aware VMEM budget (v5e/v6e: 128 MiB, v7x: 64 MiB) -------
    vmem_cap = 64 * 1024 * 1024           # v7x-safe fallback
    try:
        info = pltpu.get_tpu_info()
        vmem_cap = int(getattr(info, "vmem_capacity_bytes", vmem_cap) or vmem_cap)
    except Exception:
        pass
    tile_budget = int(vmem_cap * 0.60)
    vmem_limit = int(vmem_cap * 0.90)

    # Per-row footprint: 2 inputs x double-buffer (dtype bytes, lane-padded)
    # plus ~6 chunk-wide f32 temporaries from the chunked reduction body.
    per_row = 2 * 2 * d_pad * itemsize + 6 * chunk_eff * 4
    max_tb = max(sub, (tile_budget // per_row) // sub * sub)

    tb = min(_round_up(B, sub), max_tb)
    if block_b is not None:
        tb = min(tb, _round_up(block_b, sub))
    tb = max(tb, sub)

    num_tiles = pl.cdiv(B, tb)
    nc = 2 if num_tiles >= 2 else 1       # two-TC split (v7x); harmless serial loop on 1-TC chips
    tpc = pl.cdiv(num_tiles, nc)
    need_mask = (nc * tpc * tb) != B

    if nc * tpc == num_tiles:
        in_map = lambda c, i: (c * tpc + i, 0)
    else:
        # Clamp overhang tiles into range; their rows are masked in-kernel.
        in_map = lambda c, i: (jnp.minimum(c * tpc + i, num_tiles - 1), 0)

    kernel = functools.partial(
        _cosine_loss_kernel, batch=B, block_b=tb, tiles_per_core=tpc,
        need_mask=need_mask, chunk=chunk)

    partials = pl.pallas_call(
        kernel,
        out_shape=jax.ShapeDtypeStruct((nc, 8, 128), jnp.float32),
        grid_spec=pltpu.PrefetchScalarGridSpec(
            num_scalar_prefetch=0,
            grid=(nc, tpc),
            in_specs=[
                pl.BlockSpec((tb, D), in_map),
                pl.BlockSpec((tb, D), in_map),
            ],
            out_specs=pl.BlockSpec((1, 8, 128), lambda c, i: (c, 0, 0)),
            scratch_shapes=[pltpu.SMEM((1,), jnp.float32)],
        ),
        compiler_params=pltpu.CompilerParams(
            dimension_semantics=("parallel", "arbitrary"),
            vmem_limit_bytes=vmem_limit,
        ),
    )(x1, x2)

    # Finalize across per-core partial sums (tiny XLA op on (nc,) values).
    return 1.0 - jnp.sum(partials[:, 0, 0]) / B


def _reference(x1, x2):
    # Pure-JAX reference of the PyTorch module (product-clamped eps).
    x1 = x1.astype(jnp.float32)
    x2 = x2.astype(jnp.float32)
    dot = jnp.sum(x1 * x2, axis=1)
    n1sq = jnp.sum(x1 * x1, axis=1)
    n2sq = jnp.sum(x2 * x2, axis=1)
    cos = dot / jnp.sqrt(jnp.maximum(n1sq * n2sq, _EPS * _EPS))
    return 1.0 - jnp.mean(cos)


if __name__ == "__main__":
    key = jax.random.PRNGKey(0)
    k1, k2, k3, k4, k5, k6 = jax.random.split(key, 6)

    # Case 1: small (batch, hidden) consistent with the module.
    B, D = 8, 32
    x1 = jax.random.normal(k1, (B, D), dtype=jnp.float32)
    x2 = jax.random.normal(k2, (B, D), dtype=jnp.float32)
    loss = cosine_similarity_loss(x1, x2)
    jax.block_until_ready(loss)
    ref = _reference(x1, x2)
    assert jnp.allclose(loss, ref, atol=1e-5, rtol=1e-5), (loss, ref)

    # Case 2: multi-tile grid, two-core split with an overhang tile, remainder
    # masking and chunked feature reduction (fori_loop + static tail).
    B2, D2 = 300, 192
    y1 = jax.random.normal(k3, (B2, D2), dtype=jnp.float32)
    y2 = jax.random.normal(k4, (B2, D2), dtype=jnp.float32)
    loss2 = cosine_similarity_loss(y1, y2, block_b=64, chunk=128)
    jax.block_until_ready(loss2)
    ref2 = _reference(y1, y2)
    assert jnp.allclose(loss2, ref2, atol=1e-5, rtol=1e-5), (loss2, ref2)

    # Case 3: bf16 ingestion (halves HBM traffic; f32 accumulation in-kernel).
    B3, D3 = 64, 32
    z1 = jax.random.normal(k5, (B3, D3), dtype=jnp.bfloat16)
    z2 = jax.random.normal(k6, (B3, D3), dtype=jnp.bfloat16)
    loss3 = cosine_similarity_loss(z1, z2)
    jax.block_until_ready(loss3)
    ref3 = _reference(z1, z2)
    assert jnp.allclose(loss3, ref3, atol=2e-3, rtol=2e-3), (loss3, ref3)

    print("KERNEL_OK")
</pallas_src>

<mosaic_0001>
module attributes {stable_mosaic.version = 11 : i64} {
  func.func @_cosine_loss_kernel(%arg0: i32, %arg1: i32, %arg2: memref<8x32xf32, #tpu.memory_space<vmem>>, %arg3: memref<8x32xf32, #tpu.memory_space<vmem>>, %arg4: memref<1x8x128xf32, #tpu.memory_space<vmem>>, %arg5: memref<1xf32, #tpu.memory_space<smem>>) attributes {dimension_semantics = [#tpu.dimension_semantics<parallel>, #tpu.dimension_semantics<arbitrary>], iteration_bounds = array<i64: 1, 1>, scalar_prefetch = 0 : i64, scratch_operands = 1 : i64, tpu.core_type = #tpu.core_type<tc>, window_params = [{transform_indices = @transform_0, window_bounds = array<i64: 8, 32>}, {transform_indices = @transform_1, window_bounds = array<i64: 8, 32>}, {transform_indices = @transform_2, window_bounds = array<i64: 1, 8, 128>}]} {
    %c0_i32 = arith.constant 0 : i32
    %0 = arith.cmpi eq, %arg1, %c0_i32 : i32
    %1 = arith.extui %0 : i1 to i32
    %c0_i32_0 = arith.constant 0 : i32
    %2 = arith.cmpi ne, %1, %c0_i32_0 : i32
    scf.if %2 {
      %cst_12 = arith.constant 0.000000e+00 : f32
      %c0_13 = arith.constant 0 : index
      %29 = memref.load %arg5[%c0_13] : memref<1xf32, #tpu.memory_space<smem>>
      memref.store %cst_12, %arg5[%c0_13] : memref<1xf32, #tpu.memory_space<smem>>
    } else {
    }
    %c0 = arith.constant 0 : index
    %c0_1 = arith.constant 0 : index
    %3 = vector.load %arg2[%c0, %c0_1] : memref<8x32xf32, #tpu.memory_space<vmem>>, vector<8x32xf32>
    %c0_2 = arith.constant 0 : index
    %c0_3 = arith.constant 0 : index
    %4 = vector.load %arg3[%c0_2, %c0_3] : memref<8x32xf32, #tpu.memory_space<vmem>>, vector<8x32xf32>
    %5 = arith.mulf %3, %4 : vector<8x32xf32>
    %cst = arith.constant dense<0.000000e+00> : vector<8xf32>
    %6 = vector.multi_reduction <add>, %5, %cst [1] : vector<8x32xf32> to vector<8xf32>
    %7 = vector.shape_cast %6 : vector<8xf32> to vector<8x1xf32>
    %8 = arith.mulf %3, %3 : vector<8x32xf32>
    %cst_4 = arith.constant dense<0.000000e+00> : vector<8xf32>
    %9 = vector.multi_reduction <add>, %8, %cst_4 [1] : vector<8x32xf32> to vector<8xf32>
    %10 = vector.shape_cast %9 : vector<8xf32> to vector<8x1xf32>
    %11 = arith.mulf %4, %4 : vector<8x32xf32>
    %cst_5 = arith.constant dense<0.000000e+00> : vector<8xf32>
    %12 = vector.multi_reduction <add>, %11, %cst_5 [1] : vector<8x32xf32> to vector<8xf32>
    %13 = vector.shape_cast %12 : vector<8xf32> to vector<8x1xf32>
    %14 = arith.mulf %10, %13 : vector<8x1xf32>
    %cst_6 = arith.constant 1.000000e-16 : f32
    %15 = vector.broadcast %cst_6 : f32 to vector<8x1xf32>
    %16 = arith.maximumf %14, %15 : vector<8x1xf32>
    %17 = math.rsqrt %16 : vector<8x1xf32>
    %18 = arith.mulf %7, %17 : vector<8x1xf32>
    %c0_7 = arith.constant 0 : index
    %19 = memref.load %arg5[%c0_7] : memref<1xf32, #tpu.memory_space<smem>>
    %20 = vector.shape_cast %18 : vector<8x1xf32> to vector<1x8x1xf32>
    %cst_8 = arith.constant dense<0.000000e+00> : vector<1xf32>
    %21 = vector.multi_reduction <add>, %20, %cst_8 [1, 2] : vector<1x8x1xf32> to vector<1xf32>
    %22 = vector.shape_cast %21 : vector<1xf32> to vector<1x1x1xf32>
    %23 = vector.extract %22[0, 0, 0] : f32 from vector<1x1x1xf32>
    %24 = arith.addf %19, %23 : f32
    %c0_9 = arith.constant 0 : index
    %25 = memref.load %arg5[%c0_9] : memref<1xf32, #tpu.memory_space<smem>>
    memref.store %24, %arg5[%c0_9] : memref<1xf32, #tpu.memory_space<smem>>
    %c0_i32_10 = arith.constant 0 : i32
    %26 = arith.cmpi eq, %arg1, %c0_i32_10 : i32
    %27 = arith.extui %26 : i1 to i32
    %c0_i32_11 = arith.constant 0 : i32
    %28 = arith.cmpi ne, %27, %c0_i32_11 : i32
    scf.if %28 {
      %c0_12 = arith.constant 0 : index
      %29 = memref.load %arg5[%c0_12] : memref<1xf32, #tpu.memory_space<smem>>
      %30 = vector.broadcast %29 : f32 to vector<1x8x128xf32>
      %c0_13 = arith.constant 0 : index
      %c0_14 = arith.constant 0 : index
      %c0_15 = arith.constant 0 : index
      %31 = vector.load %arg4[%c0_13, %c0_14, %c0_15] : memref<1x8x128xf32, #tpu.memory_space<vmem>>, vector<1x8x128xf32>
      tpu.vector_store %arg4[%c0_13, %c0_14, %c0_15], %30 {strides = array<i32>} : memref<1x8x128xf32, #tpu.memory_space<vmem>>, vector<1x8x128xf32>,
    } else {
    }
    return
  }
  func.func @transform_0(%arg0: i32, %arg1: i32) -> (i32, i32) {
    %c1_i32 = arith.constant 1 : i32
    %0 = arith.muli %arg0, %c1_i32 : i32
    %1 = arith.addi %0, %arg1 : i32
    %c0_i32 = arith.constant 0 : i32
    %c0_i32_0 = arith.constant 0 : i32
    return %1, %c0_i32 : i32, i32
  }
  func.func @transform_1(%arg0: i32, %arg1: i32) -> (i32, i32) {
    %c1_i32 = arith.constant 1 : i32
    %0 = arith.muli %arg0, %c1_i32 : i32
    %1 = arith.addi %0, %arg1 : i32
    %c0_i32 = arith.constant 0 : i32
    %c0_i32_0 = arith.constant 0 : i32
    return %1, %c0_i32 : i32, i32
  }
  func.func @transform_2(%arg0: i32, %arg1: i32) -> (i32, i32, i32) {
    %c0_i32 = arith.constant 0 : i32
    %c0_i32_0 = arith.constant 0 : i32
    %c0_i32_1 = arith.constant 0 : i32
    return %arg0, %c0_i32, %c0_i32_0 : i32, i32, i32
  }
}

</mosaic_0001>

<llo_original>
// kernel: tpu_custom_call.1
$region0: #{tpu_custom_call.1}
  #allocation0 [shape = 'u32[]', space=smem, size = 0x4, offset = 0x4, fixed_abs, tag = 'smem constant byte address 0x4 - core index']
  #allocation1 [shape = 'u32[144,128]{1,0:T(1,128)}', space=vmem, size = 0x12000, scoped, tag = 'internal scratch']
  #allocation2 [shape = 'f32[1]{0:T(128)}', space=smem, size = 0x200, scoped, tag = 'scratch operand']
  %s0 = inlined_call_operand.hbm [shape: f32[8,32], index: 0, kind: input, shape index: {}]
  %s1 = inlined_call_operand.hbm [shape: f32[8,32], index: 1, kind: input, shape index: {}]
  %s2 = inlined_call_operand.hbm [shape: f32[1,8,128], index: 2, kind: output, shape index: {}]
  %s3 = sld [smem:[#allocation0]]
  $region34: #{tpu_custom_call.1} parent=0
    _
  %s5 = ssub.s32 1, %s3
  %s6 = scalar_select 0, %s5, %s3
  $region1: #{tpu_custom_call.1} parent=0
    #allocation3 [shape = 'u8[4096]{0}', space=vmem, size = 0x1000, scoped, tag = 'input window, operand 0, single buffered']
    #allocation4 [shape = 's32[1]{0}', space=sflag, size = 0x4, scoped, tag = 'scoped memory for tpu_custom_call.1']
    #allocation5 [shape = 's32[1]{0}', space=sflag, size = 0x4, scoped, tag = 'scoped memory for tpu_custom_call.1']
    #allocation6 [shape = 'u8[4096]{0}', space=vmem, size = 0x1000, scoped, tag = 'input window, operand 1, single buffered']
    #allocation7 [shape = 's32[1]{0}', space=sflag, size = 0x4, scoped, tag = 'scoped memory for tpu_custom_call.1']
    #allocation8 [shape = 'u8[4096]{0}', space=vmem, size = 0x1000, scoped, tag = 'output window, operand 0, single buffered']
    %7 = vsyncpa [#allocation4], 0
    %8 = vsyncpa [#allocation7], 0
    %9 = vsyncpa [#allocation5], 0
    // Predicated region
    $region2: #{tpu_custom_call.1} parent=1 // pred_check
      _
    $region3: #{tpu_custom_call.1} parent=1 // pred_check_branch
      %11 = sbr.rel (0) target = $region5
    $region4: #{tpu_custom_call.1} parent=1 // pred_region
      %s12 = sadd.s32 0, 0
      %s14 = ssub.s32 128, 128
      %15 = vsyncadd [#allocation4], %s14
      %s16 = smul.addr %s12, 128
      %s17 = scalar_lea.hbm %s0, %s16
      %s19 = sshll.u32 [#allocation3], 4
      %s20 = int_to_ptr.vmem [resolvable:$true] %s19
      %22 = dma.hbm_to_vmem [thread:$0]  %s17, 128, %s20, [#allocation4]
    $region5: #{tpu_custom_call.1} parent=1 // pred_fallthru
      _
    // Predicated region
    $region6: #{tpu_custom_call.1} parent=1 // pred_check
      _
    $region7: #{tpu_custom_call.1} parent=1 // pred_check_branch
      %24 = sbr.rel (0) target = $region9
    $region8: #{tpu_custom_call.1} parent=1 // pred_region
      %s25 = sadd.s32 0, 0
      %s27 = ssub.s32 128, 128
      %28 = vsyncadd [#allocation7], %s27
      %s29 = smul.addr %s25, 128
      %s30 = scalar_lea.hbm %s1, %s29
      %s32 = sshll.u32 [#allocation6], 4
      %s33 = int_to_ptr.vmem [resolvable:$true] %s32
      %35 = dma.hbm_to_vmem [thread:$0]  %s30, 128, %s33, [#allocation7]
    $region9: #{tpu_custom_call.1} parent=1 // pred_fallthru
      _
    // Predicated region
    $region10: #{tpu_custom_call.1} parent=1 // pred_check
      _
    $region11: #{tpu_custom_call.1} parent=1 // pred_check_branch
      %37 = sbr.rel (0) target = $region13
    $region12: #{tpu_custom_call.1} parent=1 // pred_region
      %38 = dma.done [#allocation4], 128
    $region13: #{tpu_custom_call.1} parent=1 // pred_fallthru
      _
    // Predicated region
    $region14: #{tpu_custom_call.1} parent=1 // pred_check
      _
    $region15: #{tpu_custom_call.1} parent=1 // pred_check_branch
      %40 = sbr.rel (0) target = $region17
    $region16: #{tpu_custom_call.1} parent=1 // pred_region
      %41 = dma.done [#allocation7], 128
    $region17: #{tpu_custom_call.1} parent=1 // pred_fallthru
      _
    %s42 = sadd.s32 0, 0
    %s43 = sadd.s32 0, 0
    %p44 = scmp.eq.s32.totalorder 0, 0
    // Predicated region
    $region18: #{tpu_custom_call.1} parent=1 // pred_check
      %p45 = pneg %p44
    $region19: #{tpu_custom_call.1} parent=1 // pred_check_branch
      %47 = sbr.rel (%p45) target = $region21
    $region20: #{tpu_custom_call.1} parent=1 // pred_region
      %s48 = scalar_lea.smem [#allocation2], 0
      %49 = sst [smem:[%s48]] 0.0
    $region21: #{tpu_custom_call.1} parent=1 // pred_fallthru
      _
    %v50 = vld [vmem:[#allocation3] sm:$0xff]
    %v51 = vld [vmem:[#allocation6] sm:$0xff]
    %v52 = vmul.f32 %v50, %v51
    %vm53 = vcmask 261120
    %v54 = vsel %vm53, %v52, 0.0
    %55 = vadd.xlane.f32.xlu0 %v54
    %v56 = vpop.xlane.xlu0 %55
    %v57 = vmul.f32 %v50, %v50
    %v58 = vsel %vm53, %v57, 0.0
    %59 = vadd.xlane.f32.xlu0 %v58
    %v60 = vpop.xlane.xlu0 %59
    %v61 = vmul.f32 %v51, %v51
    %v62 = vsel %vm53, %v61, 0.0
    %63 = vadd.xlane.f32.xlu0 %v62
    %v64 = vpop.xlane.xlu0 %63
    %v65 = vmul.f32 %v60, %v64
    %v66 = vmax.f32 %v65, 1e-16
    %v67 = vrsqrt.pop %v66
    %v68 = vmul.f32 %v56, %v67
    %s69 = sld [smem:[#allocation2]]
    %vm70 = vcmask 7168
    %v71 = vsel %vm70, %v68, 0.0
    %72 = vadd.xlane.f32.xlu0 %v71
    %v73 = vpop.xlane.xlu0 %72
    %v74 = vrot.slane %v73, 4
    %v75 = vadd.f32 %v73, %v74
    %v76 = vrot.slane %v75, 2
    %v77 = vadd.f32 %v75, %v76
    %v78 = vrot.slane %v77, 1
    %v79 = vadd.f32 %v77, %v78
    %s80 = vtos %v79
    %s81 = sadd.f32 %s69, %s80
    %s82 = scalar_lea.smem [#allocation2], 0
    %83 = sst [smem:[%s82]] %s81
    // Predicated region
    $region22: #{tpu_custom_call.1} parent=1 // pred_check
      %p84 = pneg %p44
    $region23: #{tpu_custom_call.1} parent=1 // pred_check_branch
      %86 = sbr.rel (%p84) target = $region25
    $region24: #{tpu_custom_call.1} parent=1 // pred_region
      %s87 = sld [smem:[#allocation2]]
      %v88 = vstv %s87
      %89 = vst [vmem:[#allocation8] sm:$0xff] %v88
    $region25: #{tpu_custom_call.1} parent=1 // pred_fallthru
      _
    // Predicated region
    $region26: #{tpu_custom_call.1} parent=1 // pred_check
      _
    $region27: #{tpu_custom_call.1} parent=1 // pred_check_branch
      %91 = sbr.rel (0) target = $region29
    $region28: #{tpu_custom_call.1} parent=1 // pred_region
      %s93 = ssub.s32 128, 128
      %94 = vsyncadd [#allocation5], %s93
      %s96 = sshll.u32 [#allocation8], 4
      %s97 = int_to_ptr.vmem [resolvable:$true] %s96
      %99 = dma.vmem_to_hbm [thread:$0]  %s97, 128, %s2, [#allocation5]
    $region29: #{tpu_custom_call.1} parent=1 // pred_fallthru
      _
    // Predicated region
    $region30: #{tpu_custom_call.1} parent=1 // pred_check
      _
    $region31: #{tpu_custom_call.1} parent=1 // pred_check_branch
      %101 = sbr.rel (0) target = $region33
    $region32: #{tpu_custom_call.1} parent=1 // pred_region
      %102 = dma.done [#allocation5], 128
    $region33: #{tpu_custom_call.1} parent=1 // pred_fallthru
      _
    %103 = vsyncpa [#allocation4], 1
    %104 = vsyncpa [#allocation7], 1
    %105 = vsyncpa [#allocation5], 1

</llo_original>
